<compile_context>
chip_gen: v7x
topology: tpu7x:2x2x1
jax: 0.10.0
libtpu: 0.0.40
codegen_flags: <defaults>
</compile_context>

<pallas_src>
import functools

import jax
import jax.numpy as jnp
from jax import lax
from jax.experimental import pallas as pl
from jax.experimental.pallas import tpu as pltpu


def _round_up(x: int, m: int) -> int:
    return ((x + m - 1) // m) * m


# --------------------------------------------------------------------------
# Shared parameter prep: fused, pre-transposed, zero-padded weight + bias.
#   W = [W_ih^T ; W_hh^T]  (K_pad, H_pad),  b = b_ih + b_hh  (1, H_pad)
# Zero-padded rows/cols keep padded lanes at tanh(0)=0 (sliced off later).
# --------------------------------------------------------------------------
def _prepare_fused_params(w_ih, b_ih, w_hh, b_hh, compute_dtype):
    hidden_size, input_size = w_ih.shape
    assert w_hh.shape == (hidden_size, hidden_size)
    H_pad = _round_up(hidden_size, 128)     # lane-dense output / weight columns
    I_pad = _round_up(input_size, 128)
    K_pad = I_pad + H_pad

    w = jnp.zeros((K_pad, H_pad), compute_dtype)
    w = w.at[:input_size, :hidden_size].set(jnp.asarray(w_ih, compute_dtype).T)
    w = w.at[I_pad:I_pad + hidden_size, :hidden_size].set(
        jnp.asarray(w_hh, compute_dtype).T)

    b = jnp.zeros((1, H_pad), jnp.float32)
    b = b.at[0, :hidden_size].set(
        jnp.asarray(b_ih, jnp.float32) + jnp.asarray(b_hh, jnp.float32))
    return w, b, (input_size, hidden_size, I_pad, H_pad, K_pad)


# --------------------------------------------------------------------------
# Single-step cell kernel (the module's forward): one fused matmul + tanh.
# x and h arrive as separate VMEM inputs; the fused operand is built in a
# VMEM scratch (no wrapper-side concat / HBM round-trip).
# --------------------------------------------------------------------------
def _fused_rnn_cell_kernel(x_ref, h_ref, w_ref, b_ref, out_ref, act,
                           *, i_pad, h_pad, compute_dtype):
    act[:, :i_pad] = x_ref[...].astype(compute_dtype)
    act[:, i_pad:i_pad + h_pad] = h_ref[...].astype(compute_dtype)
    z = jnp.dot(act[...], w_ref[...], preferred_element_type=jnp.float32)
    out_ref[...] = jnp.tanh(z + b_ref[...]).astype(out_ref.dtype)


def make_rnn_cell(w_ih, b_ih, w_hh, b_hh, *, compute_dtype=jnp.float32):
    """Prepare fused/padded params ONCE; return a jitted (x, h) -> h' step."""
    w_f, b_f, (input_size, hidden_size, I_pad, H_pad, K_pad) = \
        _prepare_fused_params(w_ih, b_ih, w_hh, b_hh, compute_dtype)

    kernel = functools.partial(_fused_rnn_cell_kernel, i_pad=I_pad,
                               h_pad=H_pad, compute_dtype=compute_dtype)

    @jax.jit
    def step(x, h):
        B = x.shape[0]
        B_pad = _round_up(B, 8)
        x_p = x.astype(compute_dtype)
        h_p = h.astype(compute_dtype)
        if B_pad != B or I_pad != input_size:
            x_p = jnp.pad(x_p, ((0, B_pad - B), (0, I_pad - input_size)))
        if B_pad != B or H_pad != hidden_size:
            h_p = jnp.pad(h_p, ((0, B_pad - B), (0, H_pad - hidden_size)))
        b_full = jnp.broadcast_to(b_f, (B_pad, H_pad))

        out = pl.pallas_call(
            kernel,
            out_shape=jax.ShapeDtypeStruct((B_pad, H_pad), jnp.float32),
            in_specs=[
                pl.BlockSpec((B_pad, I_pad), lambda: (0, 0)),
                pl.BlockSpec((B_pad, H_pad), lambda: (0, 0)),
                pl.BlockSpec((K_pad, H_pad), lambda: (0, 0)),
                pl.BlockSpec((B_pad, H_pad), lambda: (0, 0)),
            ],
            out_specs=pl.BlockSpec((B_pad, H_pad), lambda: (0, 0)),
            scratch_shapes=[pltpu.VMEM((B_pad, K_pad), compute_dtype)],
        )(x_p, h_p, w_f, b_full)

        if B_pad != B or H_pad != hidden_size:
            out = out[:B, :hidden_size]
        return out

    return step


# --------------------------------------------------------------------------
# Whole-sequence kernel: one pallas_call, grid=(NB, T_pad//T_BLK).
#   * weights + bias resident in VMEM (constant index_map)
#   * hidden state lives in the last H_pad columns of a persistent
#     (B_blk, K_pad) VMEM activation scratch -> ONE fused matmul per step
#   * T_BLK steps per grid step via lax.fori_loop(unroll=True)
#   * leading batch axis is "parallel" (megacore on v7x), time axis "arbitrary"
# --------------------------------------------------------------------------
def _rnn_seq_kernel(x_ref, h0_ref, w_ref, b_ref, out_ref, act,
                    *, t_blk, i_pad, h_pad, compute_dtype):
    @pl.when(pl.program_id(1) == 0)
    def _():
        # New batch block: (re)load the initial hidden state into the scratch.
        act[:, i_pad:i_pad + h_pad] = h0_ref[...].astype(compute_dtype)

    bias = b_ref[...]                       # (B_blk, H_pad) f32, loaded once

    def step(i, carry):
        act[:, :i_pad] = x_ref[i].astype(compute_dtype)
        z = jnp.dot(act[...], w_ref[...], preferred_element_type=jnp.float32)
        h_new = jnp.tanh(z + bias)          # f32 elementwise path
        act[:, i_pad:i_pad + h_pad] = h_new.astype(compute_dtype)
        out_ref[i] = h_new.astype(out_ref.dtype)
        return carry

    lax.fori_loop(0, t_blk, step, 0, unroll=True)


def make_rnn_sequence(w_ih, b_ih, w_hh, b_hh, *, compute_dtype=jnp.float32,
                      t_blk=8):
    """Prepare params once; return jitted (x_seq[T,B,I], h0[B,H]) -> h_seq[T,B,H]."""
    w_f, b_f, (input_size, hidden_size, I_pad, H_pad, K_pad) = \
        _prepare_fused_params(w_ih, b_ih, w_hh, b_hh, compute_dtype)

    kernel = functools.partial(_rnn_seq_kernel, t_blk=t_blk, i_pad=I_pad,
                               h_pad=H_pad, compute_dtype=compute_dtype)
    itemsize = jnp.dtype(compute_dtype).itemsize

    @jax.jit
    def run(x_seq, h0):
        T, B, _ = x_seq.shape
        B_pad = _round_up(B, 8)
        # Megacore: split the batch across 2 blocks when it divides cleanly.
        NB = 2 if (B_pad % 16 == 0) else 1
        B_blk = B_pad // NB
        T_pad = _round_up(T, t_blk)
        nt = T_pad // t_blk

        # Pad only the dims that need it (single jnp.pad, skipped when aligned).
        x_p = x_seq.astype(compute_dtype)
        if T_pad != T or B_pad != B or I_pad != input_size:
            x_p = jnp.pad(x_p, ((0, T_pad - T), (0, B_pad - B),
                                (0, I_pad - input_size)))
        h0_p = h0.astype(compute_dtype)
        if B_pad != B or H_pad != hidden_size:
            h0_p = jnp.pad(h0_p, ((0, B_pad - B), (0, H_pad - hidden_size)))
        b_full = jnp.broadcast_to(b_f, (B_pad, H_pad))

        # VMEM budget: double-buffered resident weights + T_BLK x/out buffers
        # + h0/bias + activation scratch (headroom x2, capped for v7x 64 MiB).
        vmem_needed = (
            2 * K_pad * H_pad * itemsize            # fused weight (2 buffers)
            + 2 * t_blk * B_blk * I_pad * itemsize  # x blocks
            + 2 * t_blk * B_blk * H_pad * 4         # out blocks (f32)
            + 2 * B_blk * H_pad * itemsize          # h0
            + 2 * B_blk * H_pad * 4                 # bias
            + B_blk * K_pad * itemsize)             # activation scratch
        vmem_limit = min(max(2 * vmem_needed, 16 * 1024 * 1024),
                         64 * 1024 * 1024)

        out = pl.pallas_call(
            kernel,
            out_shape=jax.ShapeDtypeStruct((T_pad, B_pad, H_pad), jnp.float32),
            grid=(NB, nt),
            in_specs=[
                pl.BlockSpec((t_blk, B_blk, I_pad), lambda b, t: (t, b, 0)),
                pl.BlockSpec((B_blk, H_pad), lambda b, t: (b, 0)),   # h0
                pl.BlockSpec((K_pad, H_pad), lambda b, t: (0, 0)),   # fused W
                pl.BlockSpec((B_blk, H_pad), lambda b, t: (b, 0)),   # bias
            ],
            out_specs=pl.BlockSpec((t_blk, B_blk, H_pad),
                                   lambda b, t: (t, b, 0)),
            scratch_shapes=[pltpu.VMEM((B_blk, K_pad), compute_dtype)],
            compiler_params=pltpu.CompilerParams(
                dimension_semantics=("parallel", "arbitrary"),
                vmem_limit_bytes=int(vmem_limit)),
        )(x_p, h0_p, w_f, b_full)

        return out[:T, :B, :hidden_size]

    return run


# --------------------------------------------------------------------------
# Deterministic init matching nn.Linear (uniform(-1/sqrt(fan_in), 1/sqrt(fan_in))).
# --------------------------------------------------------------------------
def _init_linear(key, out_features, in_features):
    kw, kb = jax.random.split(key)
    bound = 1.0 / (in_features ** 0.5)
    w = jax.random.uniform(kw, (out_features, in_features), jnp.float32, -bound, bound)
    b = jax.random.uniform(kb, (out_features,), jnp.float32, -bound, bound)
    return w, b


if __name__ == "__main__":
    key = jax.random.PRNGKey(0)
    input_size, hidden_size = 16, 32
    batch_cell = 8
    batch_seq, seq_len, t_blk = 16, 10, 4     # T=10 -> padded to 12 (tail test)

    k_x, k_h, k_ih, k_hh, k_seq, k_h0 = jax.random.split(key, 6)
    x = jax.random.normal(k_x, (batch_cell, input_size), jnp.float32)
    h = jax.random.normal(k_h, (batch_cell, hidden_size), jnp.float32)
    x_seq = jax.random.normal(k_seq, (seq_len, batch_seq, input_size), jnp.float32)
    h0 = jax.random.normal(k_h0, (batch_seq, hidden_size), jnp.float32)

    w_ih, b_ih = _init_linear(k_ih, hidden_size, input_size)
    w_hh, b_hh = _init_linear(k_hh, hidden_size, hidden_size)

    # ---- single-step cell (the module's forward) ----
    cell = make_rnn_cell(w_ih, b_ih, w_hh, b_hh)
    new_hidden = jax.block_until_ready(cell(x, h))
    ref = jnp.tanh(x @ w_ih.T + b_ih + h @ w_hh.T + b_hh)
    assert new_hidden.shape == (batch_cell, hidden_size)
    assert jnp.allclose(new_hidden, ref, atol=1e-5, rtol=1e-5)

    # ---- whole sequence: time-blocked, fused matmul, megacore batch axis ----
    seq_run = make_rnn_sequence(w_ih, b_ih, w_hh, b_hh, t_blk=t_blk)
    h_seq = jax.block_until_ready(seq_run(x_seq, h0))
    h_ref = h0
    refs = []
    for t in range(seq_len):
        h_ref = jnp.tanh(x_seq[t] @ w_ih.T + b_ih + h_ref @ w_hh.T + b_hh)
        refs.append(h_ref)
    ref_seq = jnp.stack(refs)
    assert h_seq.shape == (seq_len, batch_seq, hidden_size)
    assert jnp.allclose(h_seq, ref_seq, atol=1e-4, rtol=1e-4)

    # ---- also exercise the single-batch-block (NB=1) path ----
    h_seq_small = jax.block_until_ready(
        seq_run(x_seq[:, :batch_cell], h0[:batch_cell]))
    assert jnp.allclose(h_seq_small, ref_seq[:, :batch_cell], atol=1e-4, rtol=1e-4)

    print("KERNEL_OK")
</pallas_src>

<mosaic_0001>
module attributes {stable_mosaic.version = 11 : i64} {
  func.func @_fused_rnn_cell_kernel(%arg0: memref<8x128xf32, #tpu.memory_space<vmem>>, %arg1: memref<8x128xf32, #tpu.memory_space<vmem>>, %arg2: memref<256x128xf32, #tpu.memory_space<vmem>>, %arg3: memref<8x128xf32, #tpu.memory_space<vmem>>, %arg4: memref<8x128xf32, #tpu.memory_space<vmem>>, %arg5: memref<8x256xf32, #tpu.memory_space<vmem>>) attributes {dimension_semantics = [], scalar_prefetch = 0 : i64, scratch_operands = 1 : i64, tpu.core_type = #tpu.core_type<tc>} {
    %c0 = arith.constant 0 : index
    %c0_0 = arith.constant 0 : index
    %0 = vector.load %arg0[%c0, %c0_0] : memref<8x128xf32, #tpu.memory_space<vmem>>, vector<8x128xf32>
    %c0_1 = arith.constant 0 : index
    %c0_2 = arith.constant 0 : index
    %1 = vector.load %arg5[%c0_1, %c0_2] : memref<8x256xf32, #tpu.memory_space<vmem>>, vector<8x128xf32>
    tpu.vector_store %arg5[%c0_1, %c0_2], %0 {strides = array<i32>} : memref<8x256xf32, #tpu.memory_space<vmem>>, vector<8x128xf32>,
    %c0_3 = arith.constant 0 : index
    %c0_4 = arith.constant 0 : index
    %2 = vector.load %arg1[%c0_3, %c0_4] : memref<8x128xf32, #tpu.memory_space<vmem>>, vector<8x128xf32>
    %c0_5 = arith.constant 0 : index
    %c128 = arith.constant 128 : index
    %3 = vector.load %arg5[%c0_5, %c128] : memref<8x256xf32, #tpu.memory_space<vmem>>, vector<8x128xf32>
    tpu.vector_store %arg5[%c0_5, %c128], %2 {strides = array<i32>} : memref<8x256xf32, #tpu.memory_space<vmem>>, vector<8x128xf32>,
    %c0_6 = arith.constant 0 : index
    %c0_7 = arith.constant 0 : index
    %4 = vector.load %arg5[%c0_6, %c0_7] : memref<8x256xf32, #tpu.memory_space<vmem>>, vector<8x256xf32>
    %c0_8 = arith.constant 0 : index
    %c0_9 = arith.constant 0 : index
    %5 = vector.load %arg2[%c0_8, %c0_9] : memref<256x128xf32, #tpu.memory_space<vmem>>, vector<256x128xf32>
    %cst = arith.constant dense<0.000000e+00> : vector<8x128xf32>
    %6 = tpu.matmul %4, %5, %cst {dimension_numbers = #tpu.dot_dimension_numbers<[1], [0], [0], [1], [0, 0, 1, 1], [], []>} : vector<8x256xf32>, vector<256x128xf32>, vector<8x128xf32> -> vector<8x128xf32>
    %c0_10 = arith.constant 0 : index
    %c0_11 = arith.constant 0 : index
    %7 = vector.load %arg3[%c0_10, %c0_11] : memref<8x128xf32, #tpu.memory_space<vmem>>, vector<8x128xf32>
    %8 = arith.addf %6, %7 : vector<8x128xf32>
    %9 = math.tanh %8 : vector<8x128xf32>
    %c0_12 = arith.constant 0 : index
    %c0_13 = arith.constant 0 : index
    %10 = vector.load %arg4[%c0_12, %c0_13] : memref<8x128xf32, #tpu.memory_space<vmem>>, vector<8x128xf32>
    tpu.vector_store %arg4[%c0_12, %c0_13], %9 {strides = array<i32>} : memref<8x128xf32, #tpu.memory_space<vmem>>, vector<8x128xf32>,
    return
  }
}

</mosaic_0001>

<llo_original>
// kernel: step.1
$region0: #{step.1}
  #allocation0 [shape = 'u32[]', space=smem, size = 0x4, offset = 0x4, fixed_abs, tag = 'smem constant byte address 0x4 - core index']
  #allocation1 [shape = 'u32[144,128]{1,0:T(1,128)}', space=vmem, size = 0x12000, scoped, tag = 'internal scratch']
  #allocation2 [shape = 'f32[8,256]{1,0:T(8,128)}', space=vmem, size = 0x2000, scoped, tag = 'scratch operand']
  %s0 = inlined_call_operand.vmem [shape: f32[8,128], index: 0, kind: input, shape index: {}]
  %s1 = inlined_call_operand.vmem [shape: f32[8,128], index: 1, kind: input, shape index: {}]
  %s2 = inlined_call_operand.hbm [shape: f32[256,128], index: 2, kind: input, shape index: {}]
  %s3 = inlined_call_operand.vmem [shape: f32[8,128], index: 3, kind: input, shape index: {}]
  %s4 = inlined_call_operand.hbm [shape: f32[8,128], index: 4, kind: output, shape index: {}]
  %s5 = sld [smem:[#allocation0]]
  $region30: #{step.1} parent=0
    _
  %s7 = ssub.s32 1, %s5
  %s8 = scalar_select 0, %s7, %s5
  $region1: #{step.1} parent=0
    #allocation3 [shape = 'u8[131072]{0}', space=vmem, size = 0x20000, scoped, tag = 'input window, operand 2, single buffered']
    #allocation4 [shape = 's32[1]{0}', space=sflag, size = 0x4, scoped, tag = 'scoped memory for step.1']
    #allocation5 [shape = 's32[1]{0}', space=sflag, size = 0x4, scoped, tag = 'scoped memory for step.1']
    #allocation6 [shape = 'u8[4096]{0}', space=vmem, size = 0x1000, scoped, tag = 'output window, operand 0, single buffered']
    %9 = vsyncpa [#allocation4], 0
    %10 = vsyncpa [#allocation5], 0
    // Predicated region
    $region2: #{step.1} parent=1 // pred_check
      _
    $region3: #{step.1} parent=1 // pred_check_branch
      %12 = sbr.rel (0) target = $region5
    $region4: #{step.1} parent=1 // pred_region
      _
    $region5: #{step.1} parent=1 // pred_fallthru
      _
    // Predicated region
    $region6: #{step.1} parent=1 // pred_check
      _
    $region7: #{step.1} parent=1 // pred_check_branch
      %14 = sbr.rel (0) target = $region9
    $region8: #{step.1} parent=1 // pred_region
      _
    $region9: #{step.1} parent=1 // pred_fallthru
      _
    // Predicated region
    $region10: #{step.1} parent=1 // pred_check
      _
    $region11: #{step.1} parent=1 // pred_check_branch
      %16 = sbr.rel (0) target = $region13
    $region12: #{step.1} parent=1 // pred_region
      %s18 = ssub.s32 4096, 4096
      %19 = vsyncadd [#allocation4], %s18
      %s20 = sshll.u32 [#allocation3], 4
      %s21 = int_to_ptr.vmem [resolvable:$true] %s20
      %26 = dma.hbm_to_vmem [thread:$0]  %s2, 4096, %s21, [#allocation4], 128, 128, 8
    $region13: #{step.1} parent=1 // pred_fallthru
      _
    // Predicated region
    $region14: #{step.1} parent=1 // pred_check
      _
    $region15: #{step.1} parent=1 // pred_check_branch
      %28 = sbr.rel (0) target = $region17
    $region16: #{step.1} parent=1 // pred_region
      _
    $region17: #{step.1} parent=1 // pred_fallthru
      _
    // Predicated region
    $region18: #{step.1} parent=1 // pred_check
      _
    $region19: #{step.1} parent=1 // pred_check_branch
      %30 = sbr.rel (0) target = $region21
    $region20: #{step.1} parent=1 // pred_region
      %31 = dma.done [#allocation4], 4096
    $region21: #{step.1} parent=1 // pred_fallthru
      _
    %v32 = vld [vmem:[%s0] sm:$0xff]
    %33 = vst [vmem:[#allocation2] sm:$0xff] %v32
    %v34 = vld [vmem:[%s1] sm:$0xff]
    %35 = vst [vmem:[#allocation2 + $0x8] sm:$0xff] %v34
    %v36 = vld [vmem:[#allocation2] sm:$0xff]
    %v37 = vld [vmem:[#allocation2 + $0x8] sm:$0xff]
    %v38 = vld [vmem:[#allocation3] sm:$0xff]
    %v39 = vld [vmem:[#allocation3 + $0x8] sm:$0xff]
    %v40 = vld [vmem:[#allocation3 + $0x10] sm:$0xff]
    %v41 = vld [vmem:[#allocation3 + $0x18] sm:$0xff]
    %v42 = vld [vmem:[#allocation3 + $0x20] sm:$0xff]
    %v43 = vld [vmem:[#allocation3 + $0x28] sm:$0xff]
    %v44 = vld [vmem:[#allocation3 + $0x30] sm:$0xff]
    %v45 = vld [vmem:[#allocation3 + $0x38] sm:$0xff]
    %v46 = vld [vmem:[#allocation3 + $0x40] sm:$0xff]
    %v47 = vld [vmem:[#allocation3 + $0x48] sm:$0xff]
    %v48 = vld [vmem:[#allocation3 + $0x50] sm:$0xff]
    %v49 = vld [vmem:[#allocation3 + $0x58] sm:$0xff]
    %v50 = vld [vmem:[#allocation3 + $0x60] sm:$0xff]
    %v51 = vld [vmem:[#allocation3 + $0x68] sm:$0xff]
    %v52 = vld [vmem:[#allocation3 + $0x70] sm:$0xff]
    %v53 = vld [vmem:[#allocation3 + $0x78] sm:$0xff]
    %v54 = vld [vmem:[#allocation3 + $0x80] sm:$0xff]
    %v55 = vld [vmem:[#allocation3 + $0x88] sm:$0xff]
    %v56 = vld [vmem:[#allocation3 + $0x90] sm:$0xff]
    %v57 = vld [vmem:[#allocation3 + $0x98] sm:$0xff]
    %v58 = vld [vmem:[#allocation3 + $0xa0] sm:$0xff]
    %v59 = vld [vmem:[#allocation3 + $0xa8] sm:$0xff]
    %v60 = vld [vmem:[#allocation3 + $0xb0] sm:$0xff]
    %v61 = vld [vmem:[#allocation3 + $0xb8] sm:$0xff]
    %v62 = vld [vmem:[#allocation3 + $0xc0] sm:$0xff]
    %v63 = vld [vmem:[#allocation3 + $0xc8] sm:$0xff]
    %v64 = vld [vmem:[#allocation3 + $0xd0] sm:$0xff]
    %v65 = vld [vmem:[#allocation3 + $0xd8] sm:$0xff]
    %v66 = vld [vmem:[#allocation3 + $0xe0] sm:$0xff]
    %v67 = vld [vmem:[#allocation3 + $0xe8] sm:$0xff]
    %v68 = vld [vmem:[#allocation3 + $0xf0] sm:$0xff]
    %v69 = vld [vmem:[#allocation3 + $0xf8] sm:$0xff]
    %v70 = vld [vmem:[%s3] sm:$0xff]
    %71 = vmatprep.subr.mxu0 0.0
    %72 = vmatpush1.msra.mxu0 %v38
    %73 = vmatprep.subr.mxu0 0.0
    %74 = vmatpush1.msra.mxu0 %v39
    %75 = vmatprep.subr.mxu0 0.0
    %76 = vmatpush1.msra.mxu0 %v40
    %77 = vmatprep.subr.mxu0 0.0
    %78 = vmatpush1.msra.mxu0 %v41
    %79 = vmatprep.subr.mxu0 0.0
    %80 = vmatpush1.msra.mxu0 %v42
    %81 = vmatprep.subr.mxu0 0.0
    %82 = vmatpush1.msra.mxu0 %v43
    %83 = vmatprep.subr.mxu0 0.0
    %84 = vmatpush1.msra.mxu0 %v44
    %85 = vmatprep.subr.mxu0 0.0
    %86 = vmatpush1.msra.mxu0 %v45
    %87 = vmatprep.subr.mxu0 0.0
    %88 = vmatpush1.msra.mxu0 %v46
    %89 = vmatprep.subr.mxu0 0.0
    %90 = vmatpush1.msra.mxu0 %v47
    %91 = vmatprep.subr.mxu0 0.0
    %92 = vmatpush1.msra.mxu0 %v48
    %93 = vmatprep.subr.mxu0 0.0
    %94 = vmatpush1.msra.mxu0 %v49
    %95 = vmatprep.subr.mxu0 0.0
    %96 = vmatpush1.msra.mxu0 %v50
    %97 = vmatprep.subr.mxu0 0.0
    %98 = vmatpush1.msra.mxu0 %v51
    %99 = vmatprep.subr.mxu0 0.0
    %100 = vmatpush1.msra.mxu0 %v52
    %101 = vmatprep.subr.mxu0 0.0
    %102 = vmatpush1.msra.mxu0 %v53
    %103 = vmatprep.subr.mxu0 0.0
    %104 = vmatpush1.msra.mxu0 %v54
    %105 = vmatprep.subr.mxu0 0.0
    %106 = vmatpush1.msra.mxu0 %v55
    %107 = vmatprep.subr.mxu0 0.0
    %108 = vmatpush1.msra.mxu0 %v56
    %109 = vmatprep.subr.mxu0 0.0
    %110 = vmatpush1.msra.mxu0 %v57
    %111 = vmatprep.subr.mxu0 0.0
    %112 = vmatpush1.msra.mxu0 %v58
    %113 = vmatprep.subr.mxu0 0.0
    %114 = vmatpush1.msra.mxu0 %v59
    %115 = vmatprep.subr.mxu0 0.0
    %116 = vmatpush1.msra.mxu0 %v60
    %117 = vmatprep.subr.mxu0 0.0
    %118 = vmatpush1.msra.mxu0 %v61
    %119 = vmatprep.subr.mxu0 0.0
    %120 = vmatpush1.msra.mxu0 %v62
    %121 = vmatprep.subr.mxu0 0.0
    %122 = vmatpush1.msra.mxu0 %v63
    %123 = vmatprep.subr.mxu0 0.0
    %124 = vmatpush1.msra.mxu0 %v64
    %125 = vmatprep.subr.mxu0 0.0
    %126 = vmatpush1.msra.mxu0 %v65
    %127 = vmatprep.subr.mxu0 0.0
    %128 = vmatpush1.msra.mxu0 %v66
    %129 = vmatprep.subr.mxu0 0.0
    %130 = vmatpush1.msra.mxu0 %v67
    %131 = vmatprep.subr.mxu0 0.0
    %132 = vmatpush1.msra.mxu0 %v68
    %133 = vmatprep.subr.mxu0 0.0
    %134 = vmatpush1.msra.mxu0 %v69
    %135 = vmatprep.mubr.f32.mxu0 %v37
    %136 = vmatmul.mubr.f32.gmra.mrb[0].mxu0 %v36
    %v137 = vpop.f32.mrb[0].mxu0
    %v138 = vadd.f32 %v70, %v137
    %v139 = vpop.f32.mrb[0].mxu0
    %140 = vdwg.mxu0
    %v141 = vtanh.pop %v138
    %142 = vst [vmem:[#allocation6] sm:$0xff] %v141
    // Predicated region
    $region22: #{step.1} parent=1 // pred_check
      _
    $region23: #{step.1} parent=1 // pred_check_branch
      %144 = sbr.rel (0) target = $region25
    $region24: #{step.1} parent=1 // pred_region
      %s146 = ssub.s32 128, 128
      %147 = vsyncadd [#allocation5], %s146
      %s149 = sshll.u32 [#allocation6], 4
      %s150 = int_to_ptr.vmem [resolvable:$true] %s149
      %152 = dma.vmem_to_hbm [thread:$0]  %s150, 128, %s4, [#allocation5]
    $region25: #{step.1} parent=1 // pred_fallthru
      _
    // Predicated region
    $region26: #{step.1} parent=1 // pred_check
      _
    $region27: #{step.1} parent=1 // pred_check_branch
      %154 = sbr.rel (0) target = $region29
    $region28: #{step.1} parent=1 // pred_region
      %155 = dma.done [#allocation5], 128
    $region29: #{step.1} parent=1 // pred_fallthru
      _
    %156 = vsyncpa [#allocation4], 1
    %157 = vsyncpa [#allocation5], 1

</llo_original>
